<compile_context>
chip_gen: v7x
topology: tpu7x:2x2x1
jax: 0.10.0
libtpu: 0.0.40
codegen_flags: <defaults>
</compile_context>

<pallas_src>
import math
from functools import partial

import jax
import jax.numpy as jnp
from jax.experimental import pallas as pl
from jax.experimental.pallas import tpu as pltpu

TWO_PI = 2.0 * math.pi


# ---------------------------------------------------------------- Pallas kernel
def pos_emb_kernel_t(x_ref, w_ref, o_ref, *, half_dim):
    """Transposed (feature-major, batch-on-lanes) learned sinusoidal pos emb.

    x_ref: (1, bb)         timesteps for this batch tile (batch on lanes)
    w_ref: (half_dim, 1)   learned frequencies, pre-scaled by 2*pi
    o_ref: (dim+1, bb)     output tile: row 0 = x, rows 1..half_dim = sin,
                           rows half_dim+1..2*half_dim = cos
    """
    x = x_ref[...]                                    # (1, bb)
    phase = w_ref[...] * x                            # (half_dim, bb) broadcast mul
    o_ref[0:1, :] = x.astype(o_ref.dtype)
    o_ref[1:1 + half_dim, :] = jnp.sin(phase).astype(o_ref.dtype)
    o_ref[1 + half_dim:1 + 2 * half_dim, :] = jnp.cos(phase).astype(o_ref.dtype)


# ---------------------------------------------------------------- wrappers
def learned_sinusoidal_pos_emb_t(x, weights, *, block_b=8192, out_dtype=jnp.float32):
    """Lane-dense kernel output: (dim+1, B). Preferred entry point for fusion."""
    assert block_b % 128 == 0, "block_b must be a multiple of 128 lanes"
    B = x.shape[0]
    half_dim = weights.shape[0]
    out_dim = 2 * half_dim + 1

    x_row = x.astype(jnp.float32).reshape(1, B)                       # batch on lanes
    w_col = (weights.astype(jnp.float32) * TWO_PI).reshape(half_dim, 1)

    if B <= block_b:
        # Single block equal to the full array: no lane-divisibility constraint,
        # no padding, one DMA in / one DMA out.
        bb, nb = B, 1
    else:
        # Large batch: 128-multiple lane tiles; the partial last block (if any)
        # is clamped by Pallas (tail lanes are read-unspecified / write-dropped).
        bb = block_b
        nb = pl.cdiv(B, bb)

    return pl.pallas_call(
        partial(pos_emb_kernel_t, half_dim=half_dim),
        out_shape=jax.ShapeDtypeStruct((out_dim, B), out_dtype),
        grid=(nb,),
        in_specs=[
            pl.BlockSpec((1, bb), lambda i: (0, i)),
            pl.BlockSpec((half_dim, 1), lambda i: (0, 0)),
        ],
        out_specs=pl.BlockSpec((out_dim, bb), lambda i: (0, i)),
        compiler_params=pltpu.CompilerParams(
            dimension_semantics=("parallel",)),   # shard tiles across TCs on v7x
    )(x_row, w_col)


def learned_sinusoidal_pos_emb(x, weights, *, block_b=8192, out_dtype=jnp.float32):
    """Module-semantics output: (B, 2*half_dim + 1), matching the PyTorch forward."""
    out_t = learned_sinusoidal_pos_emb_t(x, weights, block_b=block_b, out_dtype=out_dtype)
    return out_t.T   # cheap (dim+1, B) transpose; fold into the consumer when fusing


# ---------------------------------------------------------------- pure-JAX reference
def reference_forward(x, weights):
    xf = x.astype(jnp.float32)[:, None]
    freqs = xf * weights.astype(jnp.float32)[None, :] * TWO_PI
    return jnp.concatenate([xf, jnp.sin(freqs), jnp.cos(freqs)], axis=-1)


# ---------------------------------------------------------------- main
if __name__ == "__main__":
    key = jax.random.PRNGKey(0)
    kx_small, kx_large, kw = jax.random.split(key, 3)

    dim = 16                       # must be even (matches the PyTorch assert)
    half_dim = dim // 2
    weights = jax.random.normal(kw, (half_dim,), jnp.float32)

    fwd = jax.jit(learned_sinusoidal_pos_emb)

    # --- small batch: single full-array block, everything resident in VMEM ---
    B = 8
    x = jax.random.normal(kx_small, (B,), jnp.float32)
    out = jax.block_until_ready(fwd(x, weights))
    ref = reference_forward(x, weights)
    assert out.shape == (B, dim + 1) and out.dtype == jnp.float32
    err = float(jnp.max(jnp.abs(out - ref)))
    assert jnp.allclose(out, ref, atol=1e-4, rtol=1e-4), f"mismatch, max abs err = {err}"

    # --- larger, non-multiple-of-128 batch: still one block, no pad/slice glue ---
    B2 = 2500
    x2 = jax.random.normal(kx_large, (B2,), jnp.float32)
    out2 = jax.block_until_ready(fwd(x2, weights))
    ref2 = reference_forward(x2, weights)
    assert out2.shape == (B2, dim + 1)
    err2 = float(jnp.max(jnp.abs(out2 - ref2)))
    assert jnp.allclose(out2, ref2, atol=1e-4, rtol=1e-4), f"mismatch, max abs err = {err2}"

    # --- tiled multi-step grid path with a clamped partial last block ---
    fwd_tiled = jax.jit(partial(learned_sinusoidal_pos_emb, block_b=1024))
    out3 = jax.block_until_ready(fwd_tiled(x2, weights))
    err3 = float(jnp.max(jnp.abs(out3 - ref2)))
    assert jnp.allclose(out3, ref2, atol=1e-4, rtol=1e-4), f"mismatch, max abs err = {err3}"

    # --- transposed (fusion-friendly) entry point ---
    out_t = jax.block_until_ready(jax.jit(learned_sinusoidal_pos_emb_t)(x2, weights))
    assert out_t.shape == (dim + 1, B2)
    assert jnp.allclose(out_t.T, ref2, atol=1e-4, rtol=1e-4)

    print("KERNEL_OK")
</pallas_src>

<mosaic_0001>
module attributes {stable_mosaic.version = 11 : i64} {
  func.func @pos_emb_kernel_t(%arg0: i32, %arg1: memref<1x8xf32, #tpu.memory_space<vmem>>, %arg2: memref<8x1xf32, #tpu.memory_space<vmem>>, %arg3: memref<17x8xf32, #tpu.memory_space<vmem>>) attributes {dimension_semantics = [#tpu.dimension_semantics<parallel>], iteration_bounds = array<i64: 1>, scalar_prefetch = 0 : i64, scratch_operands = 0 : i64, tpu.core_type = #tpu.core_type<tc>, window_params = [{transform_indices = @transform_0, window_bounds = array<i64: 1, 8>}, {pipeline_mode = #tpu.pipeline_mode<synchronous>, transform_indices = @transform_1, window_bounds = array<i64: 8, 1>}, {transform_indices = @transform_2, window_bounds = array<i64: 17, 8>}]} {
    %c0 = arith.constant 0 : index
    %c0_0 = arith.constant 0 : index
    %0 = vector.load %arg1[%c0, %c0_0] : memref<1x8xf32, #tpu.memory_space<vmem>>, vector<1x8xf32>
    %c0_1 = arith.constant 0 : index
    %c0_2 = arith.constant 0 : index
    %1 = vector.load %arg2[%c0_1, %c0_2] : memref<8x1xf32, #tpu.memory_space<vmem>>, vector<8x1xf32>
    %2 = vector.broadcast %1 : vector<8x1xf32> to vector<8x8xf32>
    %3 = vector.broadcast %0 : vector<1x8xf32> to vector<8x8xf32>
    %4 = arith.mulf %2, %3 : vector<8x8xf32>
    %c0_3 = arith.constant 0 : index
    %c0_4 = arith.constant 0 : index
    %5 = vector.load %arg3[%c0_3, %c0_4] : memref<17x8xf32, #tpu.memory_space<vmem>>, vector<1x8xf32>
    tpu.vector_store %arg3[%c0_3, %c0_4], %0 {strides = array<i32>} : memref<17x8xf32, #tpu.memory_space<vmem>>, vector<1x8xf32>,
    %6 = math.sin %4 : vector<8x8xf32>
    %c1 = arith.constant 1 : index
    %c0_5 = arith.constant 0 : index
    %7 = vector.load %arg3[%c1, %c0_5] : memref<17x8xf32, #tpu.memory_space<vmem>>, vector<8x8xf32>
    tpu.vector_store %arg3[%c1, %c0_5], %6 {strides = array<i32>} : memref<17x8xf32, #tpu.memory_space<vmem>>, vector<8x8xf32>,
    %8 = math.cos %4 : vector<8x8xf32>
    %c9 = arith.constant 9 : index
    %c0_6 = arith.constant 0 : index
    %9 = vector.load %arg3[%c9, %c0_6] : memref<17x8xf32, #tpu.memory_space<vmem>>, vector<8x8xf32>
    tpu.vector_store %arg3[%c9, %c0_6], %8 {strides = array<i32>} : memref<17x8xf32, #tpu.memory_space<vmem>>, vector<8x8xf32>,
    return
  }
  func.func @transform_0(%arg0: i32) -> (i32, i32) {
    %c0_i32 = arith.constant 0 : i32
    %c0_i32_0 = arith.constant 0 : i32
    return %c0_i32, %arg0 : i32, i32
  }
  func.func @transform_1(%arg0: i32) -> (i32, i32) {
    %c0_i32 = arith.constant 0 : i32
    %c0_i32_0 = arith.constant 0 : i32
    %c0_i32_1 = arith.constant 0 : i32
    return %c0_i32, %c0_i32_0 : i32, i32
  }
  func.func @transform_2(%arg0: i32) -> (i32, i32) {
    %c0_i32 = arith.constant 0 : i32
    %c0_i32_0 = arith.constant 0 : i32
    return %c0_i32, %arg0 : i32, i32
  }
}

</mosaic_0001>

<llo_original>
// kernel: learned_sinusoidal_pos_emb.1
$region0: #{learned_sinusoidal_pos_emb.1}
  #allocation0 [shape = 'u32[]', space=smem, size = 0x4, offset = 0x4, fixed_abs, tag = 'smem constant byte address 0x4 - core index']
  #allocation1 [shape = 'u32[144,128]{1,0:T(1,128)}', space=vmem, size = 0x12000, scoped, tag = 'internal scratch']
  %s0 = inlined_call_operand.vmem [shape: f32[1,8], index: 0, kind: input, shape index: {}]
  %s1 = inlined_call_operand.vmem [shape: f32[8,1], index: 1, kind: input, shape index: {}]
  %s2 = inlined_call_operand.vmem [shape: f32[17,8], index: 2, kind: output, shape index: {}]
  %s3 = sld [smem:[#allocation0]]
  $region18: #{learned_sinusoidal_pos_emb.1} parent=0
    _
  %s5 = ssub.s32 1, %s3
  %s6 = scalar_select 0, %s5, %s3
  // Predicated region
  $region2: #{learned_sinusoidal_pos_emb.1} parent=0 // pred_check
    _
  $region3: #{learned_sinusoidal_pos_emb.1} parent=0 // pred_check_branch
    %8 = sbr.rel (0) target = $region5
  $region4: #{learned_sinusoidal_pos_emb.1} parent=0 // pred_region
    _
  $region5: #{learned_sinusoidal_pos_emb.1} parent=0 // pred_fallthru
    _
  // Predicated region
  $region6: #{learned_sinusoidal_pos_emb.1} parent=0 // pred_check
    _
  $region7: #{learned_sinusoidal_pos_emb.1} parent=0 // pred_check_branch
    %10 = sbr.rel (0) target = $region9
  $region8: #{learned_sinusoidal_pos_emb.1} parent=0 // pred_region
    _
  $region9: #{learned_sinusoidal_pos_emb.1} parent=0 // pred_fallthru
    _
  %v11 = vld [vmem:[%s0] sm:$0x1]
  %v12 = vld [vmem:[%s1] sm:$0xff]
  %14 = vset.pattern.permute.xlu0 0
  %15 = vperm.xlu0 %14, %v12
  %v16 = vpop.permute.xlu0 %15
  %v19 = vlaneseq
  %v20 = vshrl.u32 %v19, 7
  %v21 = vsub.s32 0, %v20
  %v22 = vrot.slane %v11, %v21
  %v24 = vmul.f32 %v16, %v22
  %vm25 = vcmask 57344
  %26 = vst.msk [vmem:[%s2] sm:$0x1] %vm25, %v11
  %v27 = vand.u32 2147483647, %v24
  %vm28 = vcmp.le.f32.partialorder %v27, 0.7853982
  %vm29 = vcmp.lt.s32.totalorder %v24, 0
  %v30 = vand.u32 %v24, 2139095040
  %v31 = vshrl.u32 %v30, 23
  %v32 = vsub.s32 %v31, 127
  %v33 = vand.u32 2147483647, %v24
  %v34 = vand.u32 %v33, 8388607
  %v35 = vor.u32 %v34, 8388608
  %v36 = vsub.s32 0, %v35
  %v37 = vadd.s32 %v32, 1
  %vm38 = vcmp.gt.s32.totalorder %v37, 0
  %v39 = vsel %vm38, %v37, 0
  %v40 = vshrl.u32 %v39, 5
  %v41 = vand.u32 %v39, 31
  %v42 = vsub.s32 32, %v41
  %v43 = vshrl.u32 683565275, %v42
  %v44 = vshll.u32 683565275, %v41
  %v45 = vshrl.u32 2475754826, %v42
  %v46 = vor.u32 %v44, %v45
  %v47 = vshll.u32 2475754826, %v41
  %v48 = vshrl.u32 2131351028, %v42
  %v49 = vor.u32 %v47, %v48
  %v50 = vshll.u32 2131351028, %v41
  %v51 = vshrl.u32 2102212464, %v42
  %v52 = vor.u32 %v50, %v51
  %v53 = vshll.u32 2102212464, %v41
  %v54 = vshrl.u32 920167782, %v42
  %v55 = vor.u32 %v53, %v54
  %v56 = vshll.u32 920167782, %v41
  %v57 = vshrl.u32 1326507024, %v42
  %v58 = vor.u32 %v56, %v57
  %vm59 = vcmp.lt.s32.totalorder %v40, 1
  %vm60 = vcmp.lt.s32.totalorder %v40, 2
  %vm61 = vcmp.lt.s32.totalorder %v40, 3
  %vm62 = vcmp.lt.s32.totalorder %v40, 4
  %v63 = vsel %vm59, %v43, %v46
  %v64 = vsel %vm62, %v52, 2102212464
  %v65 = vsel %vm61, %v49, %v64
  %v66 = vsel %vm60, %v63, %v65
  %v67 = vsel %vm59, %v46, %v49
  %v68 = vsel %vm62, %v55, 920167782
  %v69 = vsel %vm61, %v52, %v68
  %v70 = vsel %vm60, %v67, %v69
  %v71 = vsel %vm59, %v49, %v52
  %v72 = vsel %vm62, %v58, 1326507024
  %v73 = vsel %vm61, %v55, %v72
  %v74 = vsel %vm60, %v71, %v73
  %v75 = vshll.u32 %v35, 8
  %v76 = vmul.u32.u64.compose %v75, %v74
  %v77 = vextract.low.u32 %v76
  %v78 = vextract.high.u32 %v76
  %v79 = vmul.u32.u64.compose %v75, %v70
  %v80 = vextract.low.u32 %v79
  %v81 = vextract.high.u32 %v79
  %v82 = vmul.u32 %v75, %v66
  %v83 = vadd.s32 %v78, %v80
  %vm84 = vc.u32 %v78, %v80
  %v85 = vadd.s32 %v81, 1
  %v86 = vsel %vm84, %v85, %v81
  %v87 = vadd.s32 %v82, %v86
  %v88 = vadd.s32 %v87, 536870912
  %v89 = vshrl.u32 %v88, 30
  %v90 = vshll.u32 %v89, 30
  %v91 = vsub.s32 %v87, %v90
  %vm92 = vcmp.lt.s32.totalorder %v91, 0
  %v93 = vsub.s32 0, %v91
  %v94 = vsel %vm92, %v93, %v91
  %v95 = vclz %v94
  %v96 = vsub.s32 %v95, 2
  %vm97 = vcmp.gt.s32.totalorder 0, %v96
  %v98 = vsel %vm97, 0, %v96
  %v99 = vsub.s32 32, %v98
  %v100 = vshll.u32 %v91, %v98
  %v101 = vshrl.u32 %v83, %v99
  %v102 = vor.u32 %v100, %v101
  %v103 = vsub.s32 4294967266, %v98
  %v104 = vadd.s32 %v103, 127
  %v105 = vshll.u32 %v104, 23
  %v106 = vor.u32 4788187, %v105
  %v107 = vand.u32 2147483647, %v106
  %v109 = vcvt.s32.f32 %v102
  %v110 = vmul.f32 %v109, %v107
  %v111 = vxor.u32 %v110, 2147483648
  %v112 = vsel %vm29, %v111, %v110
  %v113 = vsub.s32 4, %v89
  %v114 = vsel %vm29, %v113, %v89
  %v115 = vsel %vm28, %v24, %v112
  %v116 = vsel %vm28, 0, %v114
  %v117 = vcosq.f32.pop %v115
  %v118 = vsinq.f32.pop %v115
  %vm119 = vweird.f32 %v24
  %v120 = vadd.s32 %v116, 3
  %v121 = vand.u32 %v120, 3
  %vm122 = vcmp.lt.s32.totalorder %v121, 2
  %vm123 = vcmp.eq.s32.totalorder %v121, 0
  %v124 = vxor.u32 %v118, 2147483648
  %v125 = vsel %vm123, %v117, %v124
  %vm126 = vcmp.eq.s32.totalorder %v121, 2
  %v127 = vxor.u32 %v117, 2147483648
  %v128 = vsel %vm126, %v127, %v118
  %v129 = vsel %vm122, %v125, %v128
  %v130 = vsel %vm119, nan, %v129
  %vm131 = vcmask 64512
  %132 = vst.msk [vmem:[%s2 + $0x1] sm:$0xff] %vm131, %v130
  %v133 = vand.u32 2147483647, %v24
  %vm134 = vcmp.le.f32.partialorder %v133, 0.7853982
  %vm135 = vcmp.lt.s32.totalorder %v24, 0
  %v136 = vand.u32 %v24, 2139095040
  %v137 = vshrl.u32 %v136, 23
  %v138 = vsub.s32 %v137, 127
  %v139 = vand.u32 2147483647, %v24
  %v140 = vand.u32 %v139, 8388607
  %v141 = vor.u32 %v140, 8388608
  %v142 = vsub.s32 0, %v141
  %v143 = vadd.s32 %v138, 1
  %vm144 = vcmp.gt.s32.totalorder %v143, 0
  %v145 = vsel %vm144, %v143, 0
  %v146 = vshrl.u32 %v145, 5
  %v147 = vand.u32 %v145, 31
  %v148 = vsub.s32 32, %v147
  %v149 = vshrl.u32 683565275, %v148
  %v150 = vshll.u32 683565275, %v147
  %v151 = vshrl.u32 2475754826, %v148
  %v152 = vor.u32 %v150, %v151
  %v153 = vshll.u32 2475754826, %v147
  %v154 = vshrl.u32 2131351028, %v148
  %v155 = vor.u32 %v153, %v154
  %v156 = vshll.u32 2131351028, %v147
  %v157 = vshrl.u32 2102212464, %v148
  %v158 = vor.u32 %v156, %v157
  %v159 = vshll.u32 2102212464, %v147
  %v160 = vshrl.u32 920167782, %v148
  %v161 = vor.u32 %v159, %v160
  %v162 = vshll.u32 920167782, %v147
  %v163 = vshrl.u32 1326507024, %v148
  %v164 = vor.u32 %v162, %v163
  %vm165 = vcmp.lt.s32.totalorder %v146, 1
  %vm166 = vcmp.lt.s32.totalorder %v146, 2
  %vm167 = vcmp.lt.s32.totalorder %v146, 3
  %vm168 = vcmp.lt.s32.totalorder %v146, 4
  %v169 = vsel %vm165, %v149, %v152
  %v170 = vsel %vm168, %v158, 2102212464
  %v171 = vsel %vm167, %v155, %v170
  %v172 = vsel %vm166, %v169, %v171
  %v173 = vsel %vm165, %v152, %v155
  %v174 = vsel %vm168, %v161, 920167782
  %v175 = vsel %vm167, %v158, %v174
  %v176 = vsel %vm166, %v173, %v175
  %v177 = vsel %vm165, %v155, %v158
  %v178 = vsel %vm168, %v164, 1326507024
  %v179 = vsel %vm167, %v161, %v178
  %v180 = vsel %vm166, %v177, %v179
  %v181 = vshll.u32 %v141, 8
  %v182 = vmul.u32.u64.compose %v181, %v180
  %v183 = vextract.low.u32 %v182
  %v184 = vextract.high.u32 %v182
  %v185 = vmul.u32.u64.compose %v181, %v176
  %v186 = vextract.low.u32 %v185
  %v187 = vextract.high.u32 %v185
  %v188 = vmul.u32 %v181, %v172
  %v189 = vadd.s32 %v184, %v186
  %vm190 = vc.u32 %v184, %v186
  %v191 = vadd.s32 %v187, 1
  %v192 = vsel %vm190, %v191, %v187
  %v193 = vadd.s32 %v188, %v192
  %v194 = vadd.s32 %v193, 536870912
  %v195 = vshrl.u32 %v194, 30
  %v196 = vshll.u32 %v195, 30
  %v197 = vsub.s32 %v193, %v196
  %vm198 = vcmp.lt.s32.totalorder %v197, 0
  %v199 = vsub.s32 0, %v197
  %v200 = vsel %vm198, %v199, %v197
  %v201 = vclz %v200
  %v202 = vsub.s32 %v201, 2
  %vm203 = vcmp.gt.s32.totalorder 0, %v202
  %v204 = vsel %vm203, 0, %v202
  %v205 = vsub.s32 32, %v204
  %v206 = vshll.u32 %v197, %v204
  %v207 = vshrl.u32 %v189, %v205
  %v208 = vor.u32 %v206, %v207
  %v209 = vsub.s32 4294967266, %v204
  %v210 = vadd.s32 %v209, 127
  %v211 = vshll.u32 %v210, 23
  %v212 = vor.u32 4788187, %v211
  %v213 = vand.u32 2147483647, %v212
  %v215 = vcvt.s32.f32 %v208
  %v216 = vmul.f32 %v215, %v213
  %v217 = vxor.u32 %v216, 2147483648
  %v218 = vsel %vm135, %v217, %v216
  %v219 = vsub.s32 4, %v195
  %v220 = vsel %vm135, %v219, %v195
  %v221 = vsel %vm134, %v24, %v218
  %v222 = vsel %vm134, 0, %v220
  %v223 = vcosq.f32.pop %v221
  %v224 = vsinq.f32.pop %v221
  %vm225 = vweird.f32 %v24
  %v226 = vand.u32 %v222, 3
  %vm227 = vcmp.lt.s32.totalorder %v226, 2
  %vm228 = vcmp.eq.s32.totalorder %v226, 0
  %v229 = vxor.u32 %v224, 2147483648
  %v230 = vsel %vm228, %v223, %v229
  %vm231 = vcmp.eq.s32.totalorder %v226, 2
  %v232 = vxor.u32 %v223, 2147483648
  %v233 = vsel %vm231, %v232, %v224
  %v234 = vsel %vm227, %v230, %v233
  %v235 = vsel %vm225, nan, %v234
  %236 = vst.msk [vmem:[%s2 + $0x9] sm:$0xff] %vm131, %v235
  // Predicated region
  $region10: #{learned_sinusoidal_pos_emb.1} parent=0 // pred_check
    _
  $region11: #{learned_sinusoidal_pos_emb.1} parent=0 // pred_check_branch
    %238 = sbr.rel (0) target = $region13
  $region12: #{learned_sinusoidal_pos_emb.1} parent=0 // pred_region
    _
  $region13: #{learned_sinusoidal_pos_emb.1} parent=0 // pred_fallthru
    _
  // Predicated region
  $region14: #{learned_sinusoidal_pos_emb.1} parent=0 // pred_check
    _
  $region15: #{learned_sinusoidal_pos_emb.1} parent=0 // pred_check_branch
    %240 = sbr.rel (0) target = $region17
  $region16: #{learned_sinusoidal_pos_emb.1} parent=0 // pred_region
    _
  $region17: #{learned_sinusoidal_pos_emb.1} parent=0 // pred_fallthru
    _

</llo_original>
